<compile_context>
chip_gen: v5e
topology: v5e:2x2
jax: 0.10.0
libtpu: 0.0.40
codegen_flags: <defaults>
</compile_context>

<pallas_src>
import functools

import jax
import jax.numpy as jnp
from jax.experimental import pallas as pl
from jax.experimental.pallas import tpu as pltpu

ALPHA = 0.2  # pyg GCN2Conv(dim_in, alpha=0.2); theta/layer unset -> beta = 1.0


def _round_up(x, m):
    return (x + m - 1) // m * m


def _round_down_mult(x, m):
    return max(m, (x // m) * m)


def _cdiv(a, b):
    return -(-a // b)


def _vmem_capacity_bytes():
    try:
        info = pltpu.get_tpu_info()
        cap = getattr(info, "vmem_capacity_bytes", None)
        if cap:
            return int(cap)
    except Exception:
        pass
    return 64 * 1024 * 1024  # conservative default (v7x per-TensorCore)


def _pick_row_tile(n_rows8, desired):
    """Largest 8-aligned row tile <= desired with balanced tiles (minimal pad)."""
    desired = max(8, _round_down_mult(min(desired, n_rows8), 8))
    n_tiles = _cdiv(n_rows8, desired)
    tm = _round_up(_cdiv(n_rows8, n_tiles), 8)
    return tm, n_tiles * tm                      # (tile_m, padded row count)


def _pick_col_tile(n, desired):
    """Largest 128-aligned K tile <= desired with balanced tiles (minimal pad)."""
    n_cols = _round_up(n, 128)
    desired = max(128, _round_down_mult(min(desired, n_cols), 128))
    n_tiles = _cdiv(n_cols, desired)
    tk = _round_up(_cdiv(n_cols, n_tiles), 128)
    return tk, n_tiles * tk                      # (tile_k, padded col count)


# ---------------------------------------------------------------------------
# Kernels
# ---------------------------------------------------------------------------

def _gcnii_fullk_kernel(adj_ref, xw_ref, x0w_ref, xin_ref, o_ref, *, alpha, residual):
    """Primary path: 1-D grid over destination-row tiles, full-K contraction."""
    h = jnp.dot(adj_ref[...], xw_ref[...], preferred_element_type=jnp.float32)
    out = (1.0 - alpha) * h + alpha * x0w_ref[...]   # initial-residual mix (W folded)
    out = jnp.maximum(out, 0.0)                      # ReLU
    # dropout: eval-mode identity
    # TODO(synk): training-mode dropout via pltpu.prng_seed / prng_random_bits
    if residual:
        out = out + xin_ref[...]
    o_ref[...] = out.astype(o_ref.dtype)


def _gcnii_ktiled_kernel(adj_ref, xw_ref, x0w_ref, xin_ref, o_ref, acc_ref,
                         *, alpha, residual, tk):
    """Fallback for very large N: 2-D grid (row tiles x K tiles), f32 accumulator.

    xW is fully VMEM-resident (single DMA); the K chunk is sliced in-kernel.
    """
    k = pl.program_id(1)

    @pl.when(k == 0)
    def _init():
        acc_ref[...] = jnp.zeros_like(acc_ref)

    k0 = pl.multiple_of(k * tk, tk)
    acc_ref[...] += jnp.dot(adj_ref[...], xw_ref[pl.ds(k0, tk), :],
                            preferred_element_type=jnp.float32)

    @pl.when(k == pl.num_programs(1) - 1)
    def _epilogue():
        out = (1.0 - alpha) * acc_ref[...] + alpha * x0w_ref[...]
        out = jnp.maximum(out, 0.0)
        # dropout: eval-mode identity
        if residual:
            out = out + xin_ref[...]
        o_ref[...] = out.astype(o_ref.dtype)


# ---------------------------------------------------------------------------
# Wrapper
# ---------------------------------------------------------------------------

def gcn2_conv_layer(adj, x, x0, w, *, alpha=ALPHA, residual=True,
                    compute_dtype=jnp.bfloat16,
                    tile_m=None, tile_k=None, force_k_tiling=False,
                    vmem_budget_bytes=None):
    """GCNII forward.

    adj: [N, N] normalized dense adjacency (ideally already `compute_dtype`),
    x/x0: [N, C] node features, w: [C, C] weight1.
    """
    n, c = x.shape
    assert adj.shape == (n, n) and x0.shape == (n, c) and w.shape == (c, c)

    out_dtype = x.dtype
    out_isz = jnp.dtype(out_dtype).itemsize
    cd_isz = jnp.dtype(compute_dtype).itemsize

    # Fold the weight matmul out of the message-passing loop (exact: ReLU comes
    # after the full linear combination, and beta == 1).
    xw = jnp.dot(x, w, preferred_element_type=jnp.float32)
    x0w = jnp.dot(x0, w, preferred_element_type=jnp.float32)

    c_p = _round_up(c, 128)                  # lane-dense feature / output dim

    cap = _vmem_capacity_bytes()
    budget = vmem_budget_bytes if vmem_budget_bytes is not None else (cap * 3) // 4

    # ----- tile planning ---------------------------------------------------
    n_rows8 = _round_up(n, 8)
    xw_res_bytes = 2 * n * c_p * cd_isz              # resident xW (worst-case 2 bufs)
    epi_per_row = 2 * c_p * (4 + 4 + out_isz)        # x0W + xin (f32) + out, dbl-buffered
    adj_row_fullk = 2 * n * cd_isz                   # adjacency bytes / dest row, dbl-buffered

    # Megacore (v7x: 2 TensorCores): keep >= 2 row tiles on the "parallel" axis.
    mc_cap = _round_down_mult(n_rows8 // 2, 8) if n_rows8 >= 16 else n_rows8

    tm_fullk_max = max(0, budget - xw_res_bytes) // (adj_row_fullk + epi_per_row)
    use_fullk = (not force_k_tiling) and tm_fullk_max >= 8

    if use_fullk:
        desired_tm = tile_m if tile_m is not None else min(512, int(tm_fullk_max), mc_cap)
        tm, n_m = _pick_row_tile(n_rows8, desired_tm)
        tk, n_k = n, n                                # full-K: no column padding
    else:
        desired_tm = tile_m if tile_m is not None else min(256, mc_cap)
        tm, n_m = _pick_row_tile(n_rows8, desired_tm)
        if tile_k is not None:
            desired_tk = tile_k
        else:
            left = max(0, budget - xw_res_bytes - tm * epi_per_row - tm * c_p * 4)
            desired_tk = max(128, min(4096, left // (2 * tm * cd_isz)))
        tk, n_k = _pick_col_tile(n, desired_tk)

    # ----- input staging (never re-touch the N^2 adjacency if avoidable) ----
    if adj.dtype == compute_dtype and n_m == n and n_k == n:
        adj_in = adj                                  # zero-copy
    else:
        # Fallback extra pass over the adjacency (cast and/or ragged-edge pad).
        # Avoid it by producing A_hat in `compute_dtype` with tile-friendly N.
        adj_in = jnp.pad(adj.astype(compute_dtype), ((0, n_m - n), (0, n_k - n)))

    # Feature-side arrays are only O(N*C) — padding/casting them is cheap.
    xw_in = jnp.pad(xw, ((0, n_k - n), (0, c_p - c))).astype(compute_dtype)
    x0w_in = jnp.pad(x0w, ((0, n_m - n), (0, c_p - c)))             # f32, epilogue only
    xin_in = jnp.pad(x.astype(jnp.float32), ((0, n_m - n), (0, c_p - c)))

    hard_cap = (cap * 7) // 8

    if use_fullk:
        grid = (n_m // tm,)
        est = (2 * tm * n_k * cd_isz                  # adjacency row tile (2 bufs)
               + xw_res_bytes                         # resident xW
               + tm * epi_per_row)                    # epilogue + output streams
        vmem_limit = int(max(16 << 20, min(hard_cap, est + (4 << 20))))

        kernel = functools.partial(_gcnii_fullk_kernel, alpha=alpha, residual=residual)
        out = pl.pallas_call(
            kernel,
            out_shape=jax.ShapeDtypeStruct((n_m, c_p), out_dtype),
            grid_spec=pltpu.PrefetchScalarGridSpec(
                num_scalar_prefetch=0,
                grid=grid,
                in_specs=[
                    pl.BlockSpec((tm, n_k), lambda i: (i, 0)),    # A_hat row tile (bf16)
                    pl.BlockSpec((n_k, c_p), lambda i: (0, 0)),   # xW, resident (1 DMA)
                    pl.BlockSpec((tm, c_p), lambda i: (i, 0)),    # x0 W row tile (f32)
                    pl.BlockSpec((tm, c_p), lambda i: (i, 0)),    # residual x row tile
                ],
                out_specs=pl.BlockSpec((tm, c_p), lambda i: (i, 0)),
            ),
            compiler_params=pltpu.CompilerParams(
                dimension_semantics=("parallel",),
                vmem_limit_bytes=vmem_limit,
            ),
        )(adj_in, xw_in, x0w_in, xin_in)
    else:
        grid = (n_m // tm, n_k // tk)
        est = (2 * tm * tk * cd_isz                   # adjacency tile (2 bufs)
               + 2 * n_k * c_p * cd_isz               # resident xW
               + tm * epi_per_row                     # epilogue + output streams
               + tm * c_p * 4)                        # f32 accumulator
        vmem_limit = int(max(16 << 20, min(hard_cap, est + (4 << 20))))

        kernel = functools.partial(_gcnii_ktiled_kernel,
                                   alpha=alpha, residual=residual, tk=tk)
        out = pl.pallas_call(
            kernel,
            out_shape=jax.ShapeDtypeStruct((n_m, c_p), out_dtype),
            grid_spec=pltpu.PrefetchScalarGridSpec(
                num_scalar_prefetch=0,
                grid=grid,
                in_specs=[
                    pl.BlockSpec((tm, tk), lambda i, k: (i, k)),    # A_hat tile (bf16)
                    pl.BlockSpec((n_k, c_p), lambda i, k: (0, 0)),  # xW, resident (1 DMA)
                    pl.BlockSpec((tm, c_p), lambda i, k: (i, 0)),   # x0 W row tile (f32)
                    pl.BlockSpec((tm, c_p), lambda i, k: (i, 0)),   # residual x row tile
                ],
                out_specs=pl.BlockSpec((tm, c_p), lambda i, k: (i, 0)),
                scratch_shapes=[pltpu.VMEM((tm, c_p), jnp.float32)],
            ),
            compiler_params=pltpu.CompilerParams(
                dimension_semantics=("parallel", "arbitrary"),
                vmem_limit_bytes=vmem_limit,
            ),
        )(adj_in, xw_in, x0w_in, xin_in)

    return out[:n, :c]


# ---------------------------------------------------------------------------
# Glue (graph normalization) + reference
# ---------------------------------------------------------------------------

def dense_gcn_norm(edge_index, num_nodes, dtype=jnp.bfloat16):
    """Dense equivalent of pyg gcn_norm (add_self_loops=True, edge_weight=1).

    A_hat is produced directly in `dtype` so the kernel never re-casts the
    N x N matrix (the whole pipeline is adjacency-HBM-bound).
    """
    src, dst = edge_index
    a = jnp.zeros((num_nodes, num_nodes), jnp.float32)
    a = a.at[dst, src].add(1.0)                       # A[i, j] = #edges j -> i
    a = a + jnp.eye(num_nodes, dtype=jnp.float32)     # self loops
    deg = a.sum(axis=1)
    dinv = jnp.where(deg > 0, 1.0 / jnp.sqrt(deg), 0.0)
    return (dinv[:, None] * a * dinv[None, :]).astype(dtype)


def reference(adj, x, x0, w, *, alpha=ALPHA, residual=True, match_kernel_quant=False):
    """Pure-JAX reference.  match_kernel_quant=True mirrors the kernel's bf16
    adjacency / xW quantization (f32 accumulation) for a tight comparison."""
    xw = jnp.dot(x, w, preferred_element_type=jnp.float32)
    x0w = jnp.dot(x0, w, preferred_element_type=jnp.float32)
    if match_kernel_quant:
        xw = xw.astype(jnp.bfloat16).astype(jnp.float32)
    h = (1.0 - alpha) * (adj.astype(jnp.float32) @ xw) + alpha * x0w
    out = jnp.maximum(h, 0.0)
    return x + out if residual else out


if __name__ == "__main__":
    N, C = 64, 32          # num nodes, hidden channels (dim_in == dim_out)
    NUM_EDGES = 192

    key = jax.random.PRNGKey(0)
    k_x, k_x0, k_w, k_src, k_dst = jax.random.split(key, 5)

    x = jax.random.normal(k_x, (N, C), jnp.float32)
    x0 = jax.random.normal(k_x0, (N, C), jnp.float32)

    # glorot-uniform init for weight1 of shape (C, C), like pyg GCN2Conv
    bound = (6.0 / (C + C)) ** 0.5
    w = jax.random.uniform(k_w, (C, C), jnp.float32, -bound, bound)

    # deterministic random edge_index [2, E]
    src = jax.random.randint(k_src, (NUM_EDGES,), 0, N)
    dst = jax.random.randint(k_dst, (NUM_EDGES,), 0, N)
    edge_index = jnp.stack([src, dst])

    adj = dense_gcn_norm(edge_index, N)               # bf16 A_hat at creation

    # --- primary full-K path ------------------------------------------------
    out = jax.block_until_ready(gcn2_conv_layer(adj, x, x0, w, alpha=ALPHA, residual=True))
    assert out.shape == (N, C)
    ref_q = reference(adj, x, x0, w, alpha=ALPHA, residual=True, match_kernel_quant=True)
    ref_f = reference(adj, x, x0, w, alpha=ALPHA, residual=True, match_kernel_quant=False)
    assert jnp.allclose(out, ref_q, atol=1e-2, rtol=1e-2)   # quantization-matched
    assert jnp.allclose(out, ref_f, atol=5e-2, rtol=5e-2)   # vs f32 semantics

    # --- exercise the K-tiled fallback (very-large-graph path) ---------------
    N2, E2 = 384, 1536
    k2_x, k2_x0, k2_w, k2_src, k2_dst = jax.random.split(jax.random.PRNGKey(0), 5)
    x2 = jax.random.normal(k2_x, (N2, C), jnp.float32)
    x02 = jax.random.normal(k2_x0, (N2, C), jnp.float32)
    w2 = jax.random.uniform(k2_w, (C, C), jnp.float32, -bound, bound)
    src2 = jax.random.randint(k2_src, (E2,), 0, N2)
    dst2 = jax.random.randint(k2_dst, (E2,), 0, N2)
    adj2 = dense_gcn_norm(jnp.stack([src2, dst2]), N2)

    out2 = jax.block_until_ready(
        gcn2_conv_layer(adj2, x2, x02, w2, alpha=ALPHA, residual=True,
                        force_k_tiling=True, tile_m=128, tile_k=128))
    ref2 = reference(adj2, x2, x02, w2, alpha=ALPHA, residual=True, match_kernel_quant=True)
    assert out2.shape == (N2, C)
    assert jnp.allclose(out2, ref2, atol=1e-2, rtol=1e-2)

    print("KERNEL_OK")
</pallas_src>

<mosaic_0001>
module attributes {stable_mosaic.version = 11 : i64} {
  func.func @_gcnii_fullk_kernel(%arg0: i32, %arg1: memref<32x64xbf16, #tpu.memory_space<vmem>>, %arg2: memref<64x128xbf16, #tpu.memory_space<vmem>>, %arg3: memref<32x128xf32, #tpu.memory_space<vmem>>, %arg4: memref<32x128xf32, #tpu.memory_space<vmem>>, %arg5: memref<32x128xf32, #tpu.memory_space<vmem>>) attributes {dimension_semantics = [#tpu.dimension_semantics<parallel>], iteration_bounds = array<i64: 2>, scalar_prefetch = 0 : i64, scratch_operands = 0 : i64, tpu.core_type = #tpu.core_type<tc>, window_params = [{transform_indices = @transform_0, window_bounds = array<i64: 32, 64>}, {pipeline_mode = #tpu.pipeline_mode<synchronous>, transform_indices = @transform_1, window_bounds = array<i64: 64, 128>}, {transform_indices = @transform_2, window_bounds = array<i64: 32, 128>}, {transform_indices = @transform_3, window_bounds = array<i64: 32, 128>}, {transform_indices = @transform_4, window_bounds = array<i64: 32, 128>}]} {
    %c0 = arith.constant 0 : index
    %c0_0 = arith.constant 0 : index
    %0 = vector.load %arg1[%c0, %c0_0] : memref<32x64xbf16, #tpu.memory_space<vmem>>, vector<32x64xbf16>
    %c0_1 = arith.constant 0 : index
    %c0_2 = arith.constant 0 : index
    %1 = vector.load %arg2[%c0_1, %c0_2] : memref<64x128xbf16, #tpu.memory_space<vmem>>, vector<64x128xbf16>
    %cst = arith.constant dense<0.000000e+00> : vector<32x128xf32>
    %2 = tpu.matmul %0, %1, %cst {dimension_numbers = #tpu.dot_dimension_numbers<[1], [0], [0], [1], [0, 0, 1, 1], [], []>} : vector<32x64xbf16>, vector<64x128xbf16>, vector<32x128xf32> -> vector<32x128xf32>
    %cst_3 = arith.constant 8.000000e-01 : f32
    %3 = vector.broadcast %cst_3 : f32 to vector<32x128xf32>
    %4 = arith.mulf %3, %2 : vector<32x128xf32>
    %c0_4 = arith.constant 0 : index
    %c0_5 = arith.constant 0 : index
    %5 = vector.load %arg3[%c0_4, %c0_5] : memref<32x128xf32, #tpu.memory_space<vmem>>, vector<32x128xf32>
    %cst_6 = arith.constant 2.000000e-01 : f32
    %6 = vector.broadcast %cst_6 : f32 to vector<32x128xf32>
    %7 = arith.mulf %6, %5 : vector<32x128xf32>
    %8 = arith.addf %4, %7 : vector<32x128xf32>
    %cst_7 = arith.constant 0.000000e+00 : f32
    %9 = vector.broadcast %cst_7 : f32 to vector<32x128xf32>
    %10 = arith.maximumf %8, %9 : vector<32x128xf32>
    %c0_8 = arith.constant 0 : index
    %c0_9 = arith.constant 0 : index
    %11 = vector.load %arg4[%c0_8, %c0_9] : memref<32x128xf32, #tpu.memory_space<vmem>>, vector<32x128xf32>
    %12 = arith.addf %10, %11 : vector<32x128xf32>
    %c0_10 = arith.constant 0 : index
    %c0_11 = arith.constant 0 : index
    %13 = vector.load %arg5[%c0_10, %c0_11] : memref<32x128xf32, #tpu.memory_space<vmem>>, vector<32x128xf32>
    tpu.vector_store %arg5[%c0_10, %c0_11], %12 {strides = array<i32>} : memref<32x128xf32, #tpu.memory_space<vmem>>, vector<32x128xf32>,
    return
  }
  func.func @transform_0(%arg0: i32) -> (i32, i32) {
    %c0_i32 = arith.constant 0 : i32
    %c0_i32_0 = arith.constant 0 : i32
    return %arg0, %c0_i32 : i32, i32
  }
  func.func @transform_1(%arg0: i32) -> (i32, i32) {
    %c0_i32 = arith.constant 0 : i32
    %c0_i32_0 = arith.constant 0 : i32
    %c0_i32_1 = arith.constant 0 : i32
    return %c0_i32, %c0_i32_0 : i32, i32
  }
  func.func @transform_2(%arg0: i32) -> (i32, i32) {
    %c0_i32 = arith.constant 0 : i32
    %c0_i32_0 = arith.constant 0 : i32
    return %arg0, %c0_i32 : i32, i32
  }
  func.func @transform_3(%arg0: i32) -> (i32, i32) {
    %c0_i32 = arith.constant 0 : i32
    %c0_i32_0 = arith.constant 0 : i32
    return %arg0, %c0_i32 : i32, i32
  }
  func.func @transform_4(%arg0: i32) -> (i32, i32) {
    %c0_i32 = arith.constant 0 : i32
    %c0_i32_0 = arith.constant 0 : i32
    return %arg0, %c0_i32 : i32, i32
  }
}

</mosaic_0001>

<llo_original>
// kernel: tpu_custom_call.1
$region0: #{tpu_custom_call.1}
  #allocation0 [shape = 'u32[]', space=smem, size = 0x4, offset = 0x4, fixed_abs, tag = 'smem constant byte address 0x4 - core index']
  #allocation1 [shape = 'u32[72,128]{1,0:T(1,128)}', space=vmem, size = 0x9000, scoped, tag = 'internal scratch']
  %s0 = inlined_call_operand.hbm [shape: bf16[64,64], index: 0, kind: input, shape index: {}]
  %s1 = inlined_call_operand.hbm [shape: bf16[64,128], index: 1, kind: input, shape index: {}]
  %s2 = inlined_call_operand.hbm [shape: f32[64,128], index: 2, kind: input, shape index: {}]
  %s3 = inlined_call_operand.hbm [shape: f32[64,128], index: 3, kind: input, shape index: {}]
  %s4 = inlined_call_operand.hbm [shape: f32[64,128], index: 4, kind: output, shape index: {}]
  %s5 = sld [smem:[#allocation0]]
  $region65: #{tpu_custom_call.1} parent=0
    _
  %s7 = ssub.s32 1, %s5
  %s8 = scalar_select 0, %s7, %s5
  $region1: #{tpu_custom_call.1} parent=0
    #allocation2 [shape = 'u8[16384]{0}', space=vmem, size = 0x4000, scoped, tag = 'input window, operand 0']
    #allocation3 [shape = 's32[2]{0}', space=sflag, size = 0x8, scoped, tag = 'scoped memory for tpu_custom_call.1']
    #allocation4 [shape = 's32[2]{0}', space=sflag, size = 0x8, scoped, tag = 'scoped memory for tpu_custom_call.1']
    #allocation5 [shape = 'u8[16384]{0}', space=vmem, size = 0x4000, scoped, tag = 'input window, operand 1, single buffered']
    #allocation6 [shape = 's32[1]{0}', space=sflag, size = 0x4, scoped, tag = 'scoped memory for tpu_custom_call.1']
    #allocation7 [shape = 'u8[32768]{0}', space=vmem, size = 0x8000, scoped, tag = 'input window, operand 2']
    #allocation8 [shape = 'u8[32768]{0}', space=vmem, size = 0x8000, scoped, tag = 'input window, operand 3']
    #allocation9 [shape = 'u8[32768]{0}', space=vmem, size = 0x8000, scoped, tag = 'output window, operand 0']
    %9 = vsyncpa [#allocation3], 0
    %s10 = scalar_lea.sflag [#allocation3], 1
    %11 = vsyncpa %s10, 0
    %12 = vsyncpa [#allocation6], 0
    %13 = vsyncpa [#allocation4], 0
    %s14 = scalar_lea.sflag [#allocation4], 1
    %15 = vsyncpa %s14, 0
    loop: start=0, step=1, limit=4
    $region2: #{tpu_custom_call.1} parent=1 // loop_pre_header
      _
    $region3: #{tpu_custom_call.1} parent=1 // loop_header
      %s17 = sphi 0, %s21
      %p18 = scmp.ge.s32.totalorder %s17, 4
      %s27 = sphi 0, %s29
      %s30 = sphi 0, %s27
      %s31 = sphi 0, %s30
      %s47 = sphi 0, %s31
      %s51 = sphi 0, %s51
      %s53 = sphi 0, %s51
      %s54 = sphi 0, %s53
      %s68 = sphi 0, %s54
      %s74 = sphi 0, %s76
      %s77 = sphi 0, %s74
      %s78 = sphi 0, %s77
      %s94 = sphi 0, %s78
      %s100 = sphi 0, %s102
      %s103 = sphi 0, %s100
      %s104 = sphi 0, %s103
      %s120 = sphi 0, %s104
      %s126 = sphi 0, %s128
      %s129 = sphi 0, %s126
      %s130 = sphi 0, %s129
      %s146 = sphi 0, %s130
    $region4: #{tpu_custom_call.1} parent=1 // loop_header_branch
      %20 = sbr.rel (%p18) target = $region8
    $region5: #{tpu_custom_call.1} parent=1 // loop_body
      %s22 = ssub.s32 %s17, 1
      %s23 = ssub.s32 %s17, 2
      %s24 = sadd.s32 %s17, 1
      %s25 = ssub.s32 %s17, %s24
      %p26 = scmp.eq.s32.totalorder %s25, 0
      %s28 = sadd.s32 %s27, 1
      %s29 = scalar_select %p26, %s27, %s28
      %p32 = pneg %p26
      %p33 = scmp.eq.s32.totalorder %s17, 1
      %p34 = por %p32, %p33
      %p35 = scmp.ne.s32.totalorder %s27, %s30
      %p36 = scmp.eq.s32.totalorder %s17, 0
      %p37 = por %p35, %p36
      %p38 = scmp.ne.s32.totalorder %s27, %s30
      %p39 = scmp.eq.s32.totalorder %s22, 1
      %p40 = por %p38, %p39
      %p41 = scmp.ne.s32.totalorder %s30, %s31
      %p42 = scmp.eq.s32.totalorder %s22, 0
      %p43 = por %p41, %p42
      %p44 = scmp.ne.s32.totalorder %s30, %s31
      %p45 = scmp.eq.s32.totalorder %s23, 1
      %p46 = por %p44, %p45
      %p48 = scmp.ne.s32.totalorder %s31, %s47
      %p49 = scmp.eq.s32.totalorder %s23, 0
      %p50 = por %p48, %p49
      %s52 = sadd.s32 %s51, 1
      %p55 = scmp.eq.s32.totalorder %s17, 1
      %p56 = scmp.ne.s32.totalorder %s51, %s53
      %p57 = scmp.eq.s32.totalorder %s17, 0
      %p58 = por %p56, %p57
      %p59 = scmp.ne.s32.totalorder %s51, %s53
      %p60 = scmp.eq.s32.totalorder %s22, 1
      %p61 = por %p59, %p60
      %p62 = scmp.ne.s32.totalorder %s53, %s54
      %p63 = scmp.eq.s32.totalorder %s22, 0
      %p64 = por %p62, %p63
      %p65 = scmp.ne.s32.totalorder %s53, %s54
      %p66 = scmp.eq.s32.totalorder %s23, 1
      %p67 = por %p65, %p66
      %p69 = scmp.ne.s32.totalorder %s54, %s68
      %p70 = scmp.eq.s32.totalorder %s23, 0
      %p71 = por %p69, %p70
      %s72 = ssub.s32 %s17, %s24
      %p73 = scmp.eq.s32.totalorder %s72, 0
      %s75 = sadd.s32 %s74, 1
      %s76 = scalar_select %p73, %s74, %s75
      %p79 = pneg %p73
      %p80 = scmp.eq.s32.totalorder %s17, 1
      %p81 = por %p79, %p80
      %p82 = scmp.ne.s32.totalorder %s74, %s77
      %p83 = scmp.eq.s32.totalorder %s17, 0
      %p84 = por %p82, %p83
      %p85 = scmp.ne.s32.totalorder %s74, %s77
      %p86 = scmp.eq.s32.totalorder %s22, 1
      %p87 = por %p85, %p86
      %p88 = scmp.ne.s32.totalorder %s77, %s78
      %p89 = scmp.eq.s32.totalorder %s22, 0
      %p90 = por %p88, %p89
      %p91 = scmp.ne.s32.totalorder %s77, %s78
      %p92 = scmp.eq.s32.totalorder %s23, 1
      %p93 = por %p91, %p92
      %p95 = scmp.ne.s32.totalorder %s78, %s94
      %p96 = scmp.eq.s32.totalorder %s23, 0
      %p97 = por %p95, %p96
      %s98 = ssub.s32 %s17, %s24
      %p99 = scmp.eq.s32.totalorder %s98, 0
      %s101 = sadd.s32 %s100, 1
      %s102 = scalar_select %p99, %s100, %s101
      %p105 = pneg %p99
      %p106 = scmp.eq.s32.totalorder %s17, 1
      %p107 = por %p105, %p106
      %p108 = scmp.ne.s32.totalorder %s100, %s103
      %p109 = scmp.eq.s32.totalorder %s17, 0
      %p110 = por %p108, %p109
      %p111 = scmp.ne.s32.totalorder %s100, %s103
      %p112 = scmp.eq.s32.totalorder %s22, 1
      %p113 = por %p111, %p112
      %p114 = scmp.ne.s32.totalorder %s103, %s104
      %p115 = scmp.eq.s32.totalorder %s22, 0
      %p116 = por %p114, %p115
      %p117 = scmp.ne.s32.totalorder %s103, %s104
      %p118 = scmp.eq.s32.totalorder %s23, 1
      %p119 = por %p117, %p118
      %p121 = scmp.ne.s32.totalorder %s104, %s120
      %p122 = scmp.eq.s32.totalorder %s23, 0
      %p123 = por %p121, %p122
      %s124 = ssub.s32 %s17, %s24
      %p125 = scmp.eq.s32.totalorder %s124, 0
      %s127 = sadd.s32 %s126, 1
      %s128 = scalar_select %p125, %s126, %s127
      %p131 = pneg %p125
      %p132 = scmp.eq.s32.totalorder %s17, 1
      %p133 = por %p131, %p132
      %p134 = scmp.ne.s32.totalorder %s126, %s129
      %p135 = scmp.eq.s32.totalorder %s17, 0
      %p136 = por %p134, %p135
      %p137 = scmp.ne.s32.totalorder %s126, %s129
      %p138 = scmp.eq.s32.totalorder %s22, 1
      %p139 = por %p137, %p138
      %p140 = scmp.ne.s32.totalorder %s129, %s130
      %p141 = scmp.eq.s32.totalorder %s22, 0
      %p142 = por %p140, %p141
      %p143 = scmp.ne.s32.totalorder %s129, %s130
      %p144 = scmp.eq.s32.totalorder %s23, 1
      %p145 = por %p143, %p144
      %p147 = scmp.ne.s32.totalorder %s130, %s146
      %p148 = scmp.eq.s32.totalorder %s23, 0
      %p149 = por %p147, %p148
      %p150 = scmp.le.s32.totalorder 1, %s17
      %p151 = scmp.lt.s32.totalorder %s17, 3
      %p152 = pnand %p150, %p151
      %p153 = pneg %p152
      // Predicated region
      $region9: #{tpu_custom_call.1} parent=5 // pred_check
        _
      $region10: #{tpu_custom_call.1} parent=5 // pred_check_branch
        %155 = sbr.rel (%p152) target = $region12
      $region11: #{tpu_custom_call.1} parent=5 // pred_region
        %s156 = ssub.s32 %s17, 1
        // Predicated region
        $region13: #{tpu_custom_call.1} parent=11 // pred_check
          %p157 = pneg %p64
        $region14: #{tpu_custom_call.1} parent=11 // pred_check_branch
          %159 = sbr.rel (%p157) target = $region16
        $region15: #{tpu_custom_call.1} parent=11 // pred_region
          %161 = vsyncadd [#allocation6], 0
          %s162 = sshll.u32 %s1, 4
          %s163 = int_to_ptr.hbm [resolvable:$true] %s162
          %s164 = sshll.u32 [#allocation5], 4
          %s165 = int_to_ptr.vmem [resolvable:$true] %s164
          %170 = dma.hbm_to_vmem [thread:$0]  %s163, 512, %s165, [#allocation6], 64, 64, 4
        $region16: #{tpu_custom_call.1} parent=11 // pred_fallthru
          _
      $region12: #{tpu_custom_call.1} parent=5 // pred_fallthru
        _
      %p171 = scmp.lt.s32.totalorder %s17, 2
      // Predicated region
      $region17: #{tpu_custom_call.1} parent=5 // pred_check
        %p172 = pneg %p171
      $region18: #{tpu_custom_call.1} parent=5 // pred_check_branch
        %174 = sbr.rel (%p172) target = $region20
      $region19: #{tpu_custom_call.1} parent=5 // pred_region
        // Predicated region
        $region21: #{tpu_custom_call.1} parent=19 // pred_check
          %p175 = pneg %p37
        $region22: #{tpu_custom_call.1} parent=19 // pred_check_branch
          %177 = sbr.rel (%p175) target = $region24
        $region23: #{tpu_custom_call.1} parent=19 // pred_region
          %s178 = sand.u32 %s17, 1
          %s179 = scalar_lea.sflag [#allocation3], %s178
          %s180 = sand.u32 %s27, 1
          %s181 = smul.addr %s180, 16
          %s182 = scalar_lea.vmem [#allocation2], %s181
          %s183 = smul.u32 4, %s17
          %185 = vsyncadd %s179, 0
          %s186 = smul.addr %s183, 4
          %s187 = scalar_lea.hbm %s0, %s186
          %s188 = sshll.u32 %s187, 4
          %s189 = int_to_ptr.hbm [resolvable:$true] %s188
          %s190 = sshll.u32 %s182, 4
          %s191 = int_to_ptr.vmem [resolvable:$true] %s190
          %196 = dma.hbm_to_vmem [thread:$0]  %s189, 256, %s191, %s179, 64, 64, 4
        $region24: #{tpu_custom_call.1} parent=19 // pred_fallthru
          _
        // Predicated region
        $region25: #{tpu_custom_call.1} parent=19 // pred_check
          %p197 = pneg %p84
        $region26: #{tpu_custom_call.1} parent=19 // pred_check_branch
          %199 = sbr.rel (%p197) target = $region28
        $region27: #{tpu_custom_call.1} parent=19 // pred_region
          %s200 = sand.u32 %s17, 1
          %s201 = scalar_lea.sflag [#allocation3], %s200
          %s202 = sand.u32 %s74, 1
          %s203 = smul.addr %s202, 32
          %s204 = scalar_lea.vmem [#allocation7], %s203
          %s205 = smul.u32 4, %s17
          %207 = vsyncadd %s201, 0
          %s208 = smul.addr %s205, 8
          %s209 = scalar_lea.hbm %s2, %s208
          %s210 = sshll.u32 %s209, 4
          %s211 = int_to_ptr.hbm [resolvable:$true] %s210
          %s212 = sshll.u32 %s204, 4
          %s213 = int_to_ptr.vmem [resolvable:$true] %s212
          %218 = dma.hbm_to_vmem [thread:$0]  %s211, 512, %s213, %s201, 128, 128, 8
        $region28: #{tpu_custom_call.1} parent=19 // pred_fallthru
          _
        // Predicated region
        $region29: #{tpu_custom_call.1} parent=19 // pred_check
          %p219 = pneg %p110
        $region30: #{tpu_custom_call.1} parent=19 // pred_check_branch
          %221 = sbr.rel (%p219) target = $region32
        $region31: #{tpu_custom_call.1} parent=19 // pred_region
          %s222 = sand.u32 %s17, 1
          %s223 = scalar_lea.sflag [#allocation3], %s222
          %s224 = sand.u32 %s100, 1
          %s225 = smul.addr %s224, 32
          %s226 = scalar_lea.vmem [#allocation8], %s225
          %s227 = smul.u32 4, %s17
          %229 = vsyncadd %s223, 0
          %s230 = smul.addr %s227, 8
          %s231 = scalar_lea.hbm %s3, %s230
          %s232 = sshll.u32 %s231, 4
          %s233 = int_to_ptr.hbm [resolvable:$true] %s232
          %s234 = sshll.u32 %s226, 4
          %s235 = int_to_ptr.vmem [resolvable:$true] %s234
          %240 = dma.hbm_to_vmem [thread:$0]  %s233, 512, %s235, %s223, 128, 128, 8
        $region32: #{tpu_custom_call.1} parent=19 // pred_fallthru
          _
      $region20: #{tpu_custom_call.1} parent=5 // pred_fallthru
        _
      %p241 = scmp.le.s32.totalorder 1, %s17
      %p242 = scmp.lt.s32.totalorder %s17, 3
      %p243 = pnand %p241, %p242
      %p244 = pneg %p243
      // Predicated region
      $region33: #{tpu_custom_call.1} parent=5 // pred_check
        _
      $region34: #{tpu_custom_call.1} parent=5 // pred_check_branch
        %246 = sbr.rel (%p243) target = $region36
      $region35: #{tpu_custom_call.1} parent=5 // pred_region
        %s247 = ssub.s32 %s17, 1
        %s248 = sand.u32 %s22, 1
        %s249 = scalar_lea.sflag [#allocation3], %s248
        %s250 = sand.u32 %s30, 1
        %s251 = smul.addr %s250, 16
        %s252 = scalar_lea.vmem [#allocation2], %s251
        // Predicated region
        $region37: #{tpu_custom_call.1} parent=35 // pred_check
          %p253 = pneg %p43
        $region38: #{tpu_custom_call.1} parent=35 // pred_check_branch
          %255 = sbr.rel (%p253) target = $region40
        $region39: #{tpu_custom_call.1} parent=35 // pred_region
          %257 = dma.done %s249, 256
        $region40: #{tpu_custom_call.1} parent=35 // pred_fallthru
          _
        // Predicated region
        $region41: #{tpu_custom_call.1} parent=35 // pred_check
          %p258 = pneg %p64
        $region42: #{tpu_custom_call.1} parent=35 // pred_check_branch
          %260 = sbr.rel (%p258) target = $region44
        $region43: #{tpu_custom_call.1} parent=35 // pred_region
          %262 = dma.done [#allocation6], 512
        $region44: #{tpu_custom_call.1} parent=35 // pred_fallthru
          _
        %s263 = sand.u32 %s22, 1
        %s264 = scalar_lea.sflag [#allocation3], %s263
        %s265 = sand.u32 %s77, 1
        %s266 = smul.addr %s265, 32
        %s267 = scalar_lea.vmem [#allocation7], %s266
        // Predicated region
        $region45: #{tpu_custom_call.1} parent=35 // pred_check
          %p268 = pneg %p90
        $region46: #{tpu_custom_call.1} parent=35 // pred_check_branch
          %270 = sbr.rel (%p268) target = $region48
        $region47: #{tpu_custom_call.1} parent=35 // pred_region
          %272 = dma.done %s264, 512
        $region48: #{tpu_custom_call.1} parent=35 // pred_fallthru
          _
        %s273 = sand.u32 %s22, 1
        %s274 = scalar_lea.sflag [#allocation3], %s273
        %s275 = sand.u32 %s103, 1
        %s276 = smul.addr %s275, 32
        %s277 = scalar_lea.vmem [#allocation8], %s276
        // Predicated region
        $region49: #{tpu_custom_call.1} parent=35 // pred_check
          %p278 = pneg %p116
        $region50: #{tpu_custom_call.1} parent=35 // pred_check_branch
          %280 = sbr.rel (%p278) target = $region52
        $region51: #{tpu_custom_call.1} parent=35 // pred_region
          %282 = dma.done %s274, 512
        $region52: #{tpu_custom_call.1} parent=35 // pred_fallthru
          _
        %s283 = sand.u32 %s22, 1
        %s284 = scalar_lea.sflag [#allocation3], %s283
        %s285 = sand.u32 %s30, 1
        %s286 = smul.addr %s285, 16
        %s287 = scalar_lea.vmem [#allocation2], %s286
        %p288 = pneg %p43
        %p289 = pneg %p40
        %p290 = pneg %p64
        %p291 = pneg %p61
        %s292 = sand.u32 %s22, 1
        %s293 = scalar_lea.sflag [#allocation3], %s292
        %s294 = sand.u32 %s77, 1
        %s295 = smul.addr %s294, 32
        %s296 = scalar_lea.vmem [#allocation7], %s295
        %p297 = pneg %p90
        %p298 = pneg %p87
        %s299 = sand.u32 %s22, 1
        %s300 = scalar_lea.sflag [#allocation3], %s299
        %s301 = sand.u32 %s103, 1
        %s302 = smul.addr %s301, 32
        %s303 = scalar_lea.vmem [#allocation8], %s302
        %p304 = pneg %p116
        %p305 = pneg %p113
        %p306 = pneg %p142
        %p307 = pneg %p139
        %s308 = sand.u32 %s129, 1
        %s309 = scalar_lea.sflag [#allocation4], %s308
        %s310 = sand.u32 %s129, 1
        %s311 = smul.addr %s310, 32
        %s312 = scalar_lea.vmem [#allocation9], %s311
        %s313 = smul.u32 4, %s22
        %s314 = smul.u32 4, %s22
        %s315 = smul.u32 4, %s22
        %s316 = smul.u32 4, %s22
        %v318 = vld [vmem:[%s252] sm:$0xf]
        %v319 = vld [vmem:[%s252 + $0x4] sm:$0xf]
        %v320 = vld [vmem:[%s252 + $0x8] sm:$0xf]
        %v321 = vld [vmem:[%s252 + $0xc] sm:$0xf]
        %v322 = vld [vmem:[#allocation5] sm:$0xf]
        %v323 = vld [vmem:[#allocation5 + $0x4] sm:$0xf]
        %v324 = vld [vmem:[#allocation5 + $0x8] sm:$0xf]
        %v325 = vld [vmem:[#allocation5 + $0xc] sm:$0xf]
        %v326 = vld [vmem:[#allocation5 + $0x10] sm:$0xf]
        %v327 = vld [vmem:[#allocation5 + $0x14] sm:$0xf]
        %v328 = vld [vmem:[#allocation5 + $0x18] sm:$0xf]
        %v329 = vld [vmem:[#allocation5 + $0x1c] sm:$0xf]
        %v334 = vunpack.c.l.b16 %v318
        %v335 = vunpack.c.l.b16 %v319
        %v336 = vunpack.c.l.b16 %v320
        %v337 = vunpack.c.l.b16 %v321
        %v338 = vpack.c.b16 %v335, %v334
        %v339 = vpack.c.b16 %v337, %v336
        %v348 = vunpack.c.l.b16 %v322
        %v349 = vunpack.c.l.b16 %v323
        %v350 = vunpack.c.l.b16 %v324
        %v351 = vunpack.c.l.b16 %v325
        %v352 = vunpack.c.l.b16 %v326
        %v353 = vunpack.c.l.b16 %v327
        %v354 = vunpack.c.l.b16 %v328
        %v355 = vunpack.c.l.b16 %v329
        %v356 = vpack.c.b16 %v349, %v348
        %v357 = vpack.c.b16 %v351, %v350
        %v358 = vpack.c.b16 %v353, %v352
        %v359 = vpack.c.b16 %v355, %v354
        %vm364 = vcmask 523264
        %v366 = vsel %vm364, %v338, 0
        %v369 = vsel %vm364, %v339, 0
        %371 = vmatpush.bf16.msra.mxu0 0
        %372 = vmatpush.bf16.msra.mxu0 0
        %373 = vmatpush.bf16.msra.mxu0 0
        %374 = vmatpush.bf16.msra.mxu0 0
        %375 = vmatpush.bf16.msra.mxu0 %v359
        %376 = vmatpush.bf16.msra.mxu0 %v358
        %377 = vmatpush.bf16.msra.mxu0 %v357
        %378 = vmatpush.bf16.msra.mxu0 %v356
        %379 = vmatmul.bf16.gmra.mxu0 %v366
        %v380 = vpop.f32.mrf.mxu0
        %v381 = vadd.f32 0.0, %v380
        %v382 = vpop.f32.mrf.mxu0
        %v383 = vadd.f32 0.0, %v382
        %384 = vmatmul.bf16.gmra.mxu0 %v369
        %v385 = vpop.f32.mrf.mxu0
        %v386 = vadd.f32 0.0, %v385
        %v387 = vpop.f32.mrf.mxu0
        %v388 = vadd.f32 0.0, %v387
        %389 = vdwg.mxu0
        %v390 = vmul.f32 %v381, 0.8
        %v391 = vmul.f32 %v383, 0.8
        %v392 = vmul.f32 %v386, 0.8
        %v393 = vmul.f32 %v388, 0.8
        %v394 = vld [vmem:[%s267] sm:$0xff]
        %v395 = vld [vmem:[%s267 + $0x8] sm:$0xff]
        %v396 = vld [vmem:[%s267 + $0x10] sm:$0xff]
        %v397 = vld [vmem:[%s267 + $0x18] sm:$0xff]
        %v398 = vmul.f32 %v394, 0.2
        %v399 = vmul.f32 %v395, 0.2
        %v400 = vmul.f32 %v396, 0.2
        %v401 = vmul.f32 %v397, 0.2
        %v402 = vadd.f32 %v390, %v398
        %v403 = vadd.f32 %v391, %v399
        %v404 = vadd.f32 %v392, %v400
        %v405 = vadd.f32 %v393, %v401
        %v406 = vmax.f32 %v402, 0.0
        %v407 = vmax.f32 %v403, 0.0
        %v408 = vmax.f32 %v404, 0.0
        %v409 = vmax.f32 %v405, 0.0
        %v410 = vld [vmem:[%s277] sm:$0xff]
        %v411 = vld [vmem:[%s277 + $0x8] sm:$0xff]
        %v412 = vld [vmem:[%s277 + $0x10] sm:$0xff]
        %v413 = vld [vmem:[%s277 + $0x18] sm:$0xff]
        %v414 = vadd.f32 %v406, %v410
        %v415 = vadd.f32 %v407, %v411
        %v416 = vadd.f32 %v408, %v412
        %v417 = vadd.f32 %v409, %v413
        %418 = vst [vmem:[%s312] sm:$0xff] %v414
        %419 = vst [vmem:[%s312 + $0x8] sm:$0xff] %v415
        %420 = vst [vmem:[%s312 + $0x10] sm:$0xff] %v416
        %421 = vst [vmem:[%s312 + $0x18] sm:$0xff] %v417
        %s422 = sand.u32 %s129, 1
        %s423 = scalar_lea.sflag [#allocation4], %s422
        %s424 = sand.u32 %s129, 1
        %s425 = smul.addr %s424, 32
        %s426 = scalar_lea.vmem [#allocation9], %s425
        // Predicated region
        $region53: #{tpu_custom_call.1} parent=35 // pred_check
          %p427 = pneg %p139
        $region54: #{tpu_custom_call.1} parent=35 // pred_check_branch
          %429 = sbr.rel (%p427) target = $region56
        $region55: #{tpu_custom_call.1} parent=35 // pred_region
          %s430 = smul.u32 4, %s22
          %432 = vsyncadd %s423, 0
          %s433 = smul.addr %s430, 8
          %s434 = scalar_lea.hbm %s4, %s433
          %s435 = sshll.u32 %s426, 4
          %s436 = int_to_ptr.vmem [resolvable:$true] %s435
          %s437 = sshll.u32 %s434, 4
          %s438 = int_to_ptr.hbm [resolvable:$true] %s437
          %443 = dma.vmem_to_hbm [thread:$0]  %s436, 512, %s438, %s423, 128, 128, 8
        $region56: #{tpu_custom_call.1} parent=35 // pred_fallthru
          _
      $region36: #{tpu_custom_call.1} parent=5 // pred_fallthru
        _
      %p444 = scmp.le.s32.totalorder 2, %s17
      // Predicated region
      $region57: #{tpu_custom_call.1} parent=5 // pred_check
        %p445 = pneg %p444
      $region58: #{tpu_custom_call.1} parent=5 // pred_check_branch
        %447 = sbr.rel (%p445) target = $region60
      $region59: #{tpu_custom_call.1} parent=5 // pred_region
        %s448 = ssub.s32 %s17, 2
        // Predicated region
        $region61: #{tpu_custom_call.1} parent=59 // pred_check
          %p449 = pneg %p145
        $region62: #{tpu_custom_call.1} parent=59 // pred_check_branch
          %451 = sbr.rel (%p449) target = $region64
        $region63: #{tpu_custom_call.1} parent=59 // pred_region
          %s452 = sand.u32 %s130, 1
          %s453 = scalar_lea.sflag [#allocation4], %s452
          %s454 = sand.u32 %s130, 1
          %s455 = smul.addr %s454, 32
          %s456 = scalar_lea.vmem [#allocation9], %s455
          %458 = dma.done %s453, 512
        $region64: #{tpu_custom_call.1} parent=59 // pred_fallthru
          _
      $region60: #{tpu_custom_call.1} parent=5 // pred_fallthru
        _
    $region6: #{tpu_custom_call.1} parent=1 // loop_footer
      %s21 = sadd.s32 1, %s17
    $region7: #{tpu_custom_call.1} parent=1 // loop_footer_branch
      %16 = sbr.rel target = $region3
    $region8: #{tpu_custom_call.1} parent=1 // loop_exit
      _
    %459 = vsyncpa [#allocation3], 1
    %s460 = scalar_lea.sflag [#allocation3], 1
    %461 = vsyncpa %s460, 1
    %462 = vsyncpa [#allocation6], 1
    %463 = vsyncpa [#allocation4], 1
    %s464 = scalar_lea.sflag [#allocation4], 1
    %465 = vsyncpa %s464, 1

</llo_original>
